<compile_context>
chip_gen: v5e
topology: v5e:2x2
jax: 0.10.0
libtpu: 0.0.40
codegen_flags: <defaults>
</compile_context>

<pallas_src>
import functools

import jax
import jax.numpy as jnp
from jax import lax
from jax.experimental import pallas as pl
from jax.experimental.pallas import tpu as pltpu


def _round_up(v, m):
    return ((v + m - 1) // m) * m


def _make_mlp_kernel(num_layers):
    """Fused MLP forward for one batch tile.

    Kernel args:
      x_ref : (batch_tile, F) float32  -- native input layout, cast to bf16 in-kernel.
      then per layer: w_ref, b_ref
        layers 0 .. num_layers-2 : w (out, in) bf16, b (out, 1) f32   (MXU)
        layer  num_layers-1      : w (in, 1)  f32 , b (1, 1)  f32     (VPU head)
      o_ref : (1, batch_tile) f32      -- lane-dense output store.
    """
    assert num_layers >= 2

    def kernel(x_ref, *refs):
        o_ref = refs[-1]
        wb = refs[:-1]

        # --- Layer 0: contract the feature axis of the native (tile, F) input.
        # (out0, F) . (tile, F)^T -> (out0, tile): activations stay transposed so
        # every later matmul is (out, in) @ (in, tile) and the final store is
        # lane-dense.  bf16 inputs, f32 accumulation on the MXU.
        x = x_ref[...].astype(jnp.bfloat16)                          # (tile, F)
        acc = lax.dot_general(
            wb[0][...], x, (((1,), (1,)), ((), ())),
            preferred_element_type=jnp.float32) + wb[1][...]
        h = jnp.maximum(acc, 0.0)            # ReLU (Dropout = identity in eval mode)
        if num_layers > 2:
            h = h.astype(jnp.bfloat16)

        # --- Hidden layers 1 .. num_layers-2 on the MXU.
        for li in range(1, num_layers - 1):
            w = wb[2 * li][...]                                      # (out, in) bf16
            b = wb[2 * li + 1][...]                                  # (out, 1)  f32
            acc = jnp.dot(w, h, preferred_element_type=jnp.float32) + b
            h = jnp.maximum(acc, 0.0)
            if li < num_layers - 2:
                h = h.astype(jnp.bfloat16)   # last hidden stays f32 for the VPU head

        # --- Output head Linear(., 1): broadcast-multiply + sublane reduction on the
        # VPU/XLU (skips a tiny, tail-latency MXU pass), then sigmoid, lane-dense store.
        w_last = wb[2 * (num_layers - 1)][...]                       # (in_last, 1) f32
        b_last = wb[2 * (num_layers - 1) + 1][...]                   # (1, 1) f32
        logit = jnp.sum(w_last * h, axis=0, keepdims=True) + b_last  # (1, tile)
        o_ref[...] = jax.nn.sigmoid(logit).astype(o_ref.dtype)

    return kernel


@functools.partial(jax.jit, static_argnames=("batch_tile",))
def mlp_forward(x, params, *, batch_tile=None):
    """x: (B, feature_size) float32. params: list of (W (out,in) f32, b (out,) f32)."""
    B, F = x.shape
    num_layers = len(params)
    out_dim = params[-1][0].shape[0]          # = 1

    if batch_tile is None:
        # Big enough to amortize the ~0.35us/step pipeline overhead, capped at 2048 so
        # double-buffered f32 input tiles + f32 intermediates stay far under the v7x
        # 64 MiB physical VMEM, and <= cdiv(B,2) so large batches always give >= 2
        # "parallel" grid steps (both v7x TensorCores busy).  128-row alignment is
        # valid on v5e/v6e/v7x.
        batch_tile = min(2048, _round_up(-(-B // 2), 128))
    batch_tile = max(128, _round_up(batch_tile, 128))

    num_tiles = -(-B // batch_tile)           # cdiv
    b_pad = num_tiles * batch_tile

    # Native (B, F) f32 input; pad the batch only when needed (padded rows are
    # computed and then dropped by the final slice — no batch-axis reductions exist).
    x_in = x.astype(jnp.float32)
    if b_pad != B:
        x_in = jnp.pad(x_in, ((0, b_pad - B), (0, 0)))

    flat_args = [x_in]
    in_specs = [pl.BlockSpec((batch_tile, F), lambda i: (i, 0))]
    flops = 0
    param_bytes = 0
    for li, (w, b) in enumerate(params):
        out, inp = w.shape
        flops += 2 * b_pad * out * inp
        if li < num_layers - 1:
            w_arg = w.astype(jnp.bfloat16)                   # (out, in) for the MXU
        else:
            w_arg = w.astype(jnp.float32).T                  # (in, 1) for the VPU head
        b_arg = b.reshape(out, 1).astype(jnp.float32)        # (out, 1)
        flat_args.append(w_arg)
        flat_args.append(b_arg)
        param_bytes += w_arg.size * w_arg.dtype.itemsize + b_arg.size * 4
        # Weights / biases: full-array blocks, same tile every grid step (VMEM-resident).
        in_specs.append(pl.BlockSpec(w_arg.shape, lambda i: (0, 0)))
        in_specs.append(pl.BlockSpec(b_arg.shape, lambda i: (0, 0)))

    cost = pl.CostEstimate(
        flops=flops,
        transcendentals=b_pad * out_dim,
        bytes_accessed=b_pad * F * 4 + param_bytes + b_pad * out_dim * 4,
    )

    out_t = pl.pallas_call(
        _make_mlp_kernel(num_layers),
        out_shape=jax.ShapeDtypeStruct((out_dim, b_pad), jnp.float32),
        grid_spec=pltpu.PrefetchScalarGridSpec(
            num_scalar_prefetch=0,
            grid=(num_tiles,),
            in_specs=in_specs,
            out_specs=pl.BlockSpec((out_dim, batch_tile), lambda i: (0, i)),
        ),
        compiler_params=pltpu.CompilerParams(
            dimension_semantics=("parallel",),
            vmem_limit_bytes=48 * 1024 * 1024,
        ),
        cost_estimate=cost,
    )(*flat_args)

    # Back to the PyTorch module's (B, 1) output layout, dropping padded rows.
    return out_t[:, :B].T


def init_params(key, feature_size, layer_sizes=(256, 128, 64, 32)):
    """PyTorch nn.Linear-style init U(-1/sqrt(in), 1/sqrt(in)); f32 params
    in PyTorch layout: (W (out, in), b (out,))."""
    params = []
    prev = feature_size
    for out in list(layer_sizes) + [1]:
        key, kw, kb = jax.random.split(key, 3)
        bound = 1.0 / (prev ** 0.5)
        w = jax.random.uniform(kw, (out, prev), jnp.float32, -bound, bound)
        b = jax.random.uniform(kb, (out,), jnp.float32, -bound, bound)
        params.append((w, b))
        prev = out
    return params


def reference_forward(x, params):
    """Pure-JAX reference with the same dtype flow as the kernel
    (bf16 MXU matmuls with f32 accumulation, f32 VPU head)."""
    num_layers = len(params)
    h = x.astype(jnp.bfloat16).T                                       # (F, B)
    for i, (w, b) in enumerate(params):
        b_col = b.reshape(-1, 1).astype(jnp.float32)
        if i < num_layers - 1:
            acc = jnp.dot(w.astype(jnp.bfloat16), h,
                          preferred_element_type=jnp.float32) + b_col
            h = jnp.maximum(acc, 0.0)
            if i < num_layers - 2:
                h = h.astype(jnp.bfloat16)
        else:
            logit = jnp.sum(w.astype(jnp.float32).T * h, axis=0, keepdims=True) + b_col
            return jax.nn.sigmoid(logit).T                             # (B, 1)


if __name__ == "__main__":
    feature_size = 32
    batch = 8

    key = jax.random.PRNGKey(0)
    key, kx = jax.random.split(key)
    x = jax.random.normal(kx, (batch, feature_size), jnp.float32)

    params = init_params(jax.random.PRNGKey(0), feature_size)

    out = jax.block_until_ready(mlp_forward(x, params))
    ref = reference_forward(x, params)

    assert out.shape == (batch, 1), out.shape
    max_diff = float(jnp.max(jnp.abs(out - ref)))
    assert max_diff < 5e-3, f"max abs diff {max_diff}"

    print("KERNEL_OK")
</pallas_src>

<mosaic_0001>
module attributes {stable_mosaic.version = 11 : i64} {
  func.func @kernel(%arg0: i32, %arg1: memref<128x32xf32, #tpu.memory_space<vmem>>, %arg2: memref<256x32xbf16, #tpu.memory_space<vmem>>, %arg3: memref<256x1xf32, #tpu.memory_space<vmem>>, %arg4: memref<128x256xbf16, #tpu.memory_space<vmem>>, %arg5: memref<128x1xf32, #tpu.memory_space<vmem>>, %arg6: memref<64x128xbf16, #tpu.memory_space<vmem>>, %arg7: memref<64x1xf32, #tpu.memory_space<vmem>>, %arg8: memref<32x64xbf16, #tpu.memory_space<vmem>>, %arg9: memref<32x1xf32, #tpu.memory_space<vmem>>, %arg10: memref<32x1xf32, #tpu.memory_space<vmem>>, %arg11: memref<1x1xf32, #tpu.memory_space<vmem>>, %arg12: memref<1x128xf32, #tpu.memory_space<vmem>>) attributes {dimension_semantics = [#tpu.dimension_semantics<parallel>], iteration_bounds = array<i64: 1>, scalar_prefetch = 0 : i64, scratch_operands = 0 : i64, tpu.core_type = #tpu.core_type<tc>, window_params = [{transform_indices = @transform_0, window_bounds = array<i64: 128, 32>}, {pipeline_mode = #tpu.pipeline_mode<synchronous>, transform_indices = @transform_1, window_bounds = array<i64: 256, 32>}, {pipeline_mode = #tpu.pipeline_mode<synchronous>, transform_indices = @transform_2, window_bounds = array<i64: 256, 1>}, {pipeline_mode = #tpu.pipeline_mode<synchronous>, transform_indices = @transform_3, window_bounds = array<i64: 128, 256>}, {pipeline_mode = #tpu.pipeline_mode<synchronous>, transform_indices = @transform_4, window_bounds = array<i64: 128, 1>}, {pipeline_mode = #tpu.pipeline_mode<synchronous>, transform_indices = @transform_5, window_bounds = array<i64: 64, 128>}, {pipeline_mode = #tpu.pipeline_mode<synchronous>, transform_indices = @transform_6, window_bounds = array<i64: 64, 1>}, {pipeline_mode = #tpu.pipeline_mode<synchronous>, transform_indices = @transform_7, window_bounds = array<i64: 32, 64>}, {pipeline_mode = #tpu.pipeline_mode<synchronous>, transform_indices = @transform_8, window_bounds = array<i64: 32, 1>}, {pipeline_mode = #tpu.pipeline_mode<synchronous>, transform_indices = @transform_9, window_bounds = array<i64: 32, 1>}, {pipeline_mode = #tpu.pipeline_mode<synchronous>, transform_indices = @transform_10, window_bounds = array<i64: 1, 1>}, {transform_indices = @transform_11, window_bounds = array<i64: 1, 128>}]} {
    %c0 = arith.constant 0 : index
    %c0_0 = arith.constant 0 : index
    %0 = vector.load %arg1[%c0, %c0_0] : memref<128x32xf32, #tpu.memory_space<vmem>>, vector<128x32xf32>
    %1 = arith.truncf %0 : vector<128x32xf32> to vector<128x32xbf16>
    %c0_1 = arith.constant 0 : index
    %c0_2 = arith.constant 0 : index
    %2 = vector.load %arg2[%c0_1, %c0_2] : memref<256x32xbf16, #tpu.memory_space<vmem>>, vector<256x32xbf16>
    %cst = arith.constant dense<0.000000e+00> : vector<256x128xf32>
    %3 = tpu.matmul %2, %1, %cst {dimension_numbers = #tpu.dot_dimension_numbers<[1], [1], [0], [0], [0, 0, 1, 0], [], []>} : vector<256x32xbf16>, vector<128x32xbf16>, vector<256x128xf32> -> vector<256x128xf32>
    %c0_3 = arith.constant 0 : index
    %c0_4 = arith.constant 0 : index
    %4 = vector.load %arg3[%c0_3, %c0_4] : memref<256x1xf32, #tpu.memory_space<vmem>>, vector<256x1xf32>
    %5 = vector.broadcast %4 : vector<256x1xf32> to vector<256x128xf32>
    %6 = arith.addf %3, %5 : vector<256x128xf32>
    %cst_5 = arith.constant 0.000000e+00 : f32
    %7 = vector.broadcast %cst_5 : f32 to vector<256x128xf32>
    %8 = arith.maximumf %6, %7 : vector<256x128xf32>
    %9 = arith.truncf %8 : vector<256x128xf32> to vector<256x128xbf16>
    %c0_6 = arith.constant 0 : index
    %c0_7 = arith.constant 0 : index
    %10 = vector.load %arg4[%c0_6, %c0_7] : memref<128x256xbf16, #tpu.memory_space<vmem>>, vector<128x256xbf16>
    %c0_8 = arith.constant 0 : index
    %c0_9 = arith.constant 0 : index
    %11 = vector.load %arg5[%c0_8, %c0_9] : memref<128x1xf32, #tpu.memory_space<vmem>>, vector<128x1xf32>
    %cst_10 = arith.constant dense<0.000000e+00> : vector<128x128xf32>
    %12 = tpu.matmul %10, %9, %cst_10 {dimension_numbers = #tpu.dot_dimension_numbers<[1], [0], [0], [1], [0, 0, 1, 1], [], []>} : vector<128x256xbf16>, vector<256x128xbf16>, vector<128x128xf32> -> vector<128x128xf32>
    %13 = vector.broadcast %11 : vector<128x1xf32> to vector<128x128xf32>
    %14 = arith.addf %12, %13 : vector<128x128xf32>
    %cst_11 = arith.constant 0.000000e+00 : f32
    %15 = vector.broadcast %cst_11 : f32 to vector<128x128xf32>
    %16 = arith.maximumf %14, %15 : vector<128x128xf32>
    %17 = arith.truncf %16 : vector<128x128xf32> to vector<128x128xbf16>
    %c0_12 = arith.constant 0 : index
    %c0_13 = arith.constant 0 : index
    %18 = vector.load %arg6[%c0_12, %c0_13] : memref<64x128xbf16, #tpu.memory_space<vmem>>, vector<64x128xbf16>
    %c0_14 = arith.constant 0 : index
    %c0_15 = arith.constant 0 : index
    %19 = vector.load %arg7[%c0_14, %c0_15] : memref<64x1xf32, #tpu.memory_space<vmem>>, vector<64x1xf32>
    %cst_16 = arith.constant dense<0.000000e+00> : vector<64x128xf32>
    %20 = tpu.matmul %18, %17, %cst_16 {dimension_numbers = #tpu.dot_dimension_numbers<[1], [0], [0], [1], [0, 0, 1, 1], [], []>} : vector<64x128xbf16>, vector<128x128xbf16>, vector<64x128xf32> -> vector<64x128xf32>
    %21 = vector.broadcast %19 : vector<64x1xf32> to vector<64x128xf32>
    %22 = arith.addf %20, %21 : vector<64x128xf32>
    %cst_17 = arith.constant 0.000000e+00 : f32
    %23 = vector.broadcast %cst_17 : f32 to vector<64x128xf32>
    %24 = arith.maximumf %22, %23 : vector<64x128xf32>
    %25 = arith.truncf %24 : vector<64x128xf32> to vector<64x128xbf16>
    %c0_18 = arith.constant 0 : index
    %c0_19 = arith.constant 0 : index
    %26 = vector.load %arg8[%c0_18, %c0_19] : memref<32x64xbf16, #tpu.memory_space<vmem>>, vector<32x64xbf16>
    %c0_20 = arith.constant 0 : index
    %c0_21 = arith.constant 0 : index
    %27 = vector.load %arg9[%c0_20, %c0_21] : memref<32x1xf32, #tpu.memory_space<vmem>>, vector<32x1xf32>
    %cst_22 = arith.constant dense<0.000000e+00> : vector<32x128xf32>
    %28 = tpu.matmul %26, %25, %cst_22 {dimension_numbers = #tpu.dot_dimension_numbers<[1], [0], [0], [1], [0, 0, 1, 1], [], []>} : vector<32x64xbf16>, vector<64x128xbf16>, vector<32x128xf32> -> vector<32x128xf32>
    %29 = vector.broadcast %27 : vector<32x1xf32> to vector<32x128xf32>
    %30 = arith.addf %28, %29 : vector<32x128xf32>
    %cst_23 = arith.constant 0.000000e+00 : f32
    %31 = vector.broadcast %cst_23 : f32 to vector<32x128xf32>
    %32 = arith.maximumf %30, %31 : vector<32x128xf32>
    %c0_24 = arith.constant 0 : index
    %c0_25 = arith.constant 0 : index
    %33 = vector.load %arg10[%c0_24, %c0_25] : memref<32x1xf32, #tpu.memory_space<vmem>>, vector<32x1xf32>
    %c0_26 = arith.constant 0 : index
    %c0_27 = arith.constant 0 : index
    %34 = vector.load %arg11[%c0_26, %c0_27] : memref<1x1xf32, #tpu.memory_space<vmem>>, vector<1x1xf32>
    %35 = vector.broadcast %33 : vector<32x1xf32> to vector<32x128xf32>
    %36 = arith.mulf %35, %32 : vector<32x128xf32>
    %cst_28 = arith.constant dense<0.000000e+00> : vector<128xf32>
    %37 = vector.multi_reduction <add>, %36, %cst_28 [0] : vector<32x128xf32> to vector<128xf32>
    %38 = vector.shape_cast %37 : vector<128xf32> to vector<1x128xf32>
    %39 = vector.broadcast %34 : vector<1x1xf32> to vector<1x128xf32>
    %40 = arith.addf %38, %39 : vector<1x128xf32>
    %41 = arith.negf %40 : vector<1x128xf32>
    %42 = math.exp %41 : vector<1x128xf32>
    %cst_29 = arith.constant 1.000000e+00 : f32
    %43 = vector.broadcast %cst_29 : f32 to vector<1x128xf32>
    %44 = arith.addf %43, %42 : vector<1x128xf32>
    %45 = arith.divf %43, %44 : vector<1x128xf32>
    %c0_30 = arith.constant 0 : index
    %c0_31 = arith.constant 0 : index
    %46 = vector.load %arg12[%c0_30, %c0_31] : memref<1x128xf32, #tpu.memory_space<vmem>>, vector<1x128xf32>
    tpu.vector_store %arg12[%c0_30, %c0_31], %45 {strides = array<i32>} : memref<1x128xf32, #tpu.memory_space<vmem>>, vector<1x128xf32>,
    return
  }
  func.func @transform_0(%arg0: i32) -> (i32, i32) {
    %c0_i32 = arith.constant 0 : i32
    %c0_i32_0 = arith.constant 0 : i32
    return %arg0, %c0_i32 : i32, i32
  }
  func.func @transform_1(%arg0: i32) -> (i32, i32) {
    %c0_i32 = arith.constant 0 : i32
    %c0_i32_0 = arith.constant 0 : i32
    %c0_i32_1 = arith.constant 0 : i32
    return %c0_i32, %c0_i32_0 : i32, i32
  }
  func.func @transform_2(%arg0: i32) -> (i32, i32) {
    %c0_i32 = arith.constant 0 : i32
    %c0_i32_0 = arith.constant 0 : i32
    %c0_i32_1 = arith.constant 0 : i32
    return %c0_i32, %c0_i32_0 : i32, i32
  }
  func.func @transform_3(%arg0: i32) -> (i32, i32) {
    %c0_i32 = arith.constant 0 : i32
    %c0_i32_0 = arith.constant 0 : i32
    %c0_i32_1 = arith.constant 0 : i32
    return %c0_i32, %c0_i32_0 : i32, i32
  }
  func.func @transform_4(%arg0: i32) -> (i32, i32) {
    %c0_i32 = arith.constant 0 : i32
    %c0_i32_0 = arith.constant 0 : i32
    %c0_i32_1 = arith.constant 0 : i32
    return %c0_i32, %c0_i32_0 : i32, i32
  }
  func.func @transform_5(%arg0: i32) -> (i32, i32) {
    %c0_i32 = arith.constant 0 : i32
    %c0_i32_0 = arith.constant 0 : i32
    %c0_i32_1 = arith.constant 0 : i32
    return %c0_i32, %c0_i32_0 : i32, i32
  }
  func.func @transform_6(%arg0: i32) -> (i32, i32) {
    %c0_i32 = arith.constant 0 : i32
    %c0_i32_0 = arith.constant 0 : i32
    %c0_i32_1 = arith.constant 0 : i32
    return %c0_i32, %c0_i32_0 : i32, i32
  }
  func.func @transform_7(%arg0: i32) -> (i32, i32) {
    %c0_i32 = arith.constant 0 : i32
    %c0_i32_0 = arith.constant 0 : i32
    %c0_i32_1 = arith.constant 0 : i32
    return %c0_i32, %c0_i32_0 : i32, i32
  }
  func.func @transform_8(%arg0: i32) -> (i32, i32) {
    %c0_i32 = arith.constant 0 : i32
    %c0_i32_0 = arith.constant 0 : i32
    %c0_i32_1 = arith.constant 0 : i32
    return %c0_i32, %c0_i32_0 : i32, i32
  }
  func.func @transform_9(%arg0: i32) -> (i32, i32) {
    %c0_i32 = arith.constant 0 : i32
    %c0_i32_0 = arith.constant 0 : i32
    %c0_i32_1 = arith.constant 0 : i32
    return %c0_i32, %c0_i32_0 : i32, i32
  }
  func.func @transform_10(%arg0: i32) -> (i32, i32) {
    %c0_i32 = arith.constant 0 : i32
    %c0_i32_0 = arith.constant 0 : i32
    %c0_i32_1 = arith.constant 0 : i32
    return %c0_i32, %c0_i32_0 : i32, i32
  }
  func.func @transform_11(%arg0: i32) -> (i32, i32) {
    %c0_i32 = arith.constant 0 : i32
    %c0_i32_0 = arith.constant 0 : i32
    return %c0_i32, %arg0 : i32, i32
  }
}

</mosaic_0001>

<llo_original>
// kernel: mlp_forward.1
$region0: #{mlp_forward.1}
  #allocation0 [shape = 'u32[]', space=smem, size = 0x4, offset = 0x4, fixed_abs, tag = 'smem constant byte address 0x4 - core index']
  #allocation1 [shape = 'u32[72,128]{1,0:T(1,128)}', space=vmem, size = 0x9000, scoped, tag = 'internal scratch']
  #allocation2 [shape = 'f32[1,1]{1,0:T(1,128)S(1)}', space=vmem, size = 0x200, scoped, tag = 'scoped memory for mlp_forward.1']
  %s0 = inlined_call_operand.vmem [shape: f32[128,32], index: 0, kind: input, shape index: {}]
  %s1 = inlined_call_operand.vmem [shape: bf16[256,32], index: 1, kind: input, shape index: {}]
  %s2 = inlined_call_operand.vmem [shape: f32[256,1], index: 2, kind: input, shape index: {}]
  %s3 = inlined_call_operand.vmem [shape: bf16[128,256], index: 3, kind: input, shape index: {}]
  %s4 = inlined_call_operand.vmem [shape: f32[128,1], index: 4, kind: input, shape index: {}]
  %s5 = inlined_call_operand.vmem [shape: bf16[64,128], index: 5, kind: input, shape index: {}]
  %s6 = inlined_call_operand.vmem [shape: f32[64,1], index: 6, kind: input, shape index: {}]
  %s7 = inlined_call_operand.vmem [shape: bf16[32,64], index: 7, kind: input, shape index: {}]
  %s8 = inlined_call_operand.vmem [shape: f32[32,1], index: 8, kind: input, shape index: {}]
  %s9 = inlined_call_operand.vmem [shape: f32[32,1], index: 9, kind: input, shape index: {}]
  %s10 = inlined_call_operand.<no memory space> [shape: f32[1,1], index: 10, kind: input, shape index: {}]
  %s11 = inlined_call_operand.vmem [shape: f32[1,128], index: 11, kind: output, shape index: {}]
  %s12 = sld [smem:[#allocation0]]
  $region54: #{mlp_forward.1} parent=0
    _
  %s14 = ssub.s32 1, %s12
  %s15 = scalar_select 0, %s14, %s12
  %v16 = vstv %s10
  %17 = vst [vmem:[#allocation2] sm:$0x1] %v16
  // Predicated region
  $region2: #{mlp_forward.1} parent=0 // pred_check
    _
  $region3: #{mlp_forward.1} parent=0 // pred_check_branch
    %19 = sbr.rel (0) target = $region5
  $region4: #{mlp_forward.1} parent=0 // pred_region
    _
  $region5: #{mlp_forward.1} parent=0 // pred_fallthru
    _
  // Predicated region
  $region6: #{mlp_forward.1} parent=0 // pred_check
    _
  $region7: #{mlp_forward.1} parent=0 // pred_check_branch
    %21 = sbr.rel (0) target = $region9
  $region8: #{mlp_forward.1} parent=0 // pred_region
    _
  $region9: #{mlp_forward.1} parent=0 // pred_fallthru
    _
  // Predicated region
  $region10: #{mlp_forward.1} parent=0 // pred_check
    _
  $region11: #{mlp_forward.1} parent=0 // pred_check_branch
    %23 = sbr.rel (0) target = $region13
  $region12: #{mlp_forward.1} parent=0 // pred_region
    _
  $region13: #{mlp_forward.1} parent=0 // pred_fallthru
    _
  // Predicated region
  $region14: #{mlp_forward.1} parent=0 // pred_check
    _
  $region15: #{mlp_forward.1} parent=0 // pred_check_branch
    %25 = sbr.rel (0) target = $region17
  $region16: #{mlp_forward.1} parent=0 // pred_region
    _
  $region17: #{mlp_forward.1} parent=0 // pred_fallthru
    _
  // Predicated region
  $region18: #{mlp_forward.1} parent=0 // pred_check
    _
  $region19: #{mlp_forward.1} parent=0 // pred_check_branch
    %27 = sbr.rel (0) target = $region21
  $region20: #{mlp_forward.1} parent=0 // pred_region
    _
  $region21: #{mlp_forward.1} parent=0 // pred_fallthru
    _
  // Predicated region
  $region22: #{mlp_forward.1} parent=0 // pred_check
    _
  $region23: #{mlp_forward.1} parent=0 // pred_check_branch
    %29 = sbr.rel (0) target = $region25
  $region24: #{mlp_forward.1} parent=0 // pred_region
    _
  $region25: #{mlp_forward.1} parent=0 // pred_fallthru
    _
  // Predicated region
  $region26: #{mlp_forward.1} parent=0 // pred_check
    _
  $region27: #{mlp_forward.1} parent=0 // pred_check_branch
    %31 = sbr.rel (0) target = $region29
  $region28: #{mlp_forward.1} parent=0 // pred_region
    _
  $region29: #{mlp_forward.1} parent=0 // pred_fallthru
    _
  // Predicated region
  $region30: #{mlp_forward.1} parent=0 // pred_check
    _
  $region31: #{mlp_forward.1} parent=0 // pred_check_branch
    %33 = sbr.rel (0) target = $region33
  $region32: #{mlp_forward.1} parent=0 // pred_region
    _
  $region33: #{mlp_forward.1} parent=0 // pred_fallthru
    _
  // Predicated region
  $region34: #{mlp_forward.1} parent=0 // pred_check
    _
  $region35: #{mlp_forward.1} parent=0 // pred_check_branch
    %35 = sbr.rel (0) target = $region37
  $region36: #{mlp_forward.1} parent=0 // pred_region
    _
  $region37: #{mlp_forward.1} parent=0 // pred_fallthru
    _
  // Predicated region
  $region38: #{mlp_forward.1} parent=0 // pred_check
    _
  $region39: #{mlp_forward.1} parent=0 // pred_check_branch
    %37 = sbr.rel (0) target = $region41
  $region40: #{mlp_forward.1} parent=0 // pred_region
    _
  $region41: #{mlp_forward.1} parent=0 // pred_fallthru
    _
  // Predicated region
  $region42: #{mlp_forward.1} parent=0 // pred_check
    _
  $region43: #{mlp_forward.1} parent=0 // pred_check_branch
    %39 = sbr.rel (0) target = $region45
  $region44: #{mlp_forward.1} parent=0 // pred_region
    _
  $region45: #{mlp_forward.1} parent=0 // pred_fallthru
    _
  %v41 = vld [vmem:[%s0] sm:$0xff]
  %v42 = vld [vmem:[%s0 + $0x8] sm:$0xff]
  %v43 = vld [vmem:[%s0 + $0x10] sm:$0xff]
  %v44 = vld [vmem:[%s0 + $0x18] sm:$0xff]
  %v45 = vld [vmem:[%s0 + $0x20] sm:$0xff]
  %v46 = vld [vmem:[%s0 + $0x28] sm:$0xff]
  %v47 = vld [vmem:[%s0 + $0x30] sm:$0xff]
  %v48 = vld [vmem:[%s0 + $0x38] sm:$0xff]
  %v49 = vld [vmem:[%s0 + $0x40] sm:$0xff]
  %v50 = vld [vmem:[%s0 + $0x48] sm:$0xff]
  %v51 = vld [vmem:[%s0 + $0x50] sm:$0xff]
  %v52 = vld [vmem:[%s0 + $0x58] sm:$0xff]
  %v53 = vld [vmem:[%s0 + $0x60] sm:$0xff]
  %v54 = vld [vmem:[%s0 + $0x68] sm:$0xff]
  %v55 = vld [vmem:[%s0 + $0x70] sm:$0xff]
  %v56 = vld [vmem:[%s0 + $0x78] sm:$0xff]
  %v57 = vpack.c.bf16 %v42, %v41
  %v58 = vpack.c.bf16 %v44, %v43
  %v59 = vpack.c.bf16 %v46, %v45
  %v60 = vpack.c.bf16 %v48, %v47
  %v61 = vpack.c.bf16 %v50, %v49
  %v62 = vpack.c.bf16 %v52, %v51
  %v63 = vpack.c.bf16 %v54, %v53
  %v64 = vpack.c.bf16 %v56, %v55
  %v65 = vld [vmem:[%s1] sm:$0xf]
  %v66 = vld [vmem:[%s1 + $0x4] sm:$0xf]
  %v67 = vld [vmem:[%s1 + $0x8] sm:$0xf]
  %v68 = vld [vmem:[%s1 + $0xc] sm:$0xf]
  %v69 = vld [vmem:[%s1 + $0x10] sm:$0xf]
  %v70 = vld [vmem:[%s1 + $0x14] sm:$0xf]
  %v71 = vld [vmem:[%s1 + $0x18] sm:$0xf]
  %v72 = vld [vmem:[%s1 + $0x1c] sm:$0xf]
  %v73 = vld [vmem:[%s1 + $0x20] sm:$0xf]
  %v74 = vld [vmem:[%s1 + $0x24] sm:$0xf]
  %v75 = vld [vmem:[%s1 + $0x28] sm:$0xf]
  %v76 = vld [vmem:[%s1 + $0x2c] sm:$0xf]
  %v77 = vld [vmem:[%s1 + $0x30] sm:$0xf]
  %v78 = vld [vmem:[%s1 + $0x34] sm:$0xf]
  %v79 = vld [vmem:[%s1 + $0x38] sm:$0xf]
  %v80 = vld [vmem:[%s1 + $0x3c] sm:$0xf]
  %v81 = vld [vmem:[%s1 + $0x40] sm:$0xf]
  %v82 = vld [vmem:[%s1 + $0x44] sm:$0xf]
  %v83 = vld [vmem:[%s1 + $0x48] sm:$0xf]
  %v84 = vld [vmem:[%s1 + $0x4c] sm:$0xf]
  %v85 = vld [vmem:[%s1 + $0x50] sm:$0xf]
  %v86 = vld [vmem:[%s1 + $0x54] sm:$0xf]
  %v87 = vld [vmem:[%s1 + $0x58] sm:$0xf]
  %v88 = vld [vmem:[%s1 + $0x5c] sm:$0xf]
  %v89 = vld [vmem:[%s1 + $0x60] sm:$0xf]
  %v90 = vld [vmem:[%s1 + $0x64] sm:$0xf]
  %v91 = vld [vmem:[%s1 + $0x68] sm:$0xf]
  %v92 = vld [vmem:[%s1 + $0x6c] sm:$0xf]
  %v93 = vld [vmem:[%s1 + $0x70] sm:$0xf]
  %v94 = vld [vmem:[%s1 + $0x74] sm:$0xf]
  %v95 = vld [vmem:[%s1 + $0x78] sm:$0xf]
  %v96 = vld [vmem:[%s1 + $0x7c] sm:$0xf]
  %v97 = vld [vmem:[%s2] sm:$0xff]
  %v98 = vld [vmem:[%s2 + $0x8] sm:$0xff]
  %v99 = vld [vmem:[%s2 + $0x10] sm:$0xff]
  %v100 = vld [vmem:[%s2 + $0x18] sm:$0xff]
  %v101 = vld [vmem:[%s2 + $0x20] sm:$0xff]
  %v102 = vld [vmem:[%s2 + $0x28] sm:$0xff]
  %v103 = vld [vmem:[%s2 + $0x30] sm:$0xff]
  %v104 = vld [vmem:[%s2 + $0x38] sm:$0xff]
  %v105 = vld [vmem:[%s2 + $0x40] sm:$0xff]
  %v106 = vld [vmem:[%s2 + $0x48] sm:$0xff]
  %v107 = vld [vmem:[%s2 + $0x50] sm:$0xff]
  %v108 = vld [vmem:[%s2 + $0x58] sm:$0xff]
  %v109 = vld [vmem:[%s2 + $0x60] sm:$0xff]
  %v110 = vld [vmem:[%s2 + $0x68] sm:$0xff]
  %v111 = vld [vmem:[%s2 + $0x70] sm:$0xff]
  %v112 = vld [vmem:[%s2 + $0x78] sm:$0xff]
  %v113 = vld [vmem:[%s2 + $0x80] sm:$0xff]
  %v114 = vld [vmem:[%s2 + $0x88] sm:$0xff]
  %v115 = vld [vmem:[%s2 + $0x90] sm:$0xff]
  %v116 = vld [vmem:[%s2 + $0x98] sm:$0xff]
  %v117 = vld [vmem:[%s2 + $0xa0] sm:$0xff]
  %v118 = vld [vmem:[%s2 + $0xa8] sm:$0xff]
  %v119 = vld [vmem:[%s2 + $0xb0] sm:$0xff]
  %v120 = vld [vmem:[%s2 + $0xb8] sm:$0xff]
  %v121 = vld [vmem:[%s2 + $0xc0] sm:$0xff]
  %v122 = vld [vmem:[%s2 + $0xc8] sm:$0xff]
  %v123 = vld [vmem:[%s2 + $0xd0] sm:$0xff]
  %v124 = vld [vmem:[%s2 + $0xd8] sm:$0xff]
  %v125 = vld [vmem:[%s2 + $0xe0] sm:$0xff]
  %v126 = vld [vmem:[%s2 + $0xe8] sm:$0xff]
  %v127 = vld [vmem:[%s2 + $0xf0] sm:$0xff]
  %v128 = vld [vmem:[%s2 + $0xf8] sm:$0xff]
  %130 = vset.pattern.permute.xlu0 0
  %131 = vperm.xlu0 %130, %v97
  %v132 = vpop.permute.xlu0 %131
  %135 = vset.pattern.permute.xlu0 0
  %136 = vperm.xlu0 %135, %v98
  %v137 = vpop.permute.xlu0 %136
  %140 = vset.pattern.permute.xlu0 0
  %141 = vperm.xlu0 %140, %v99
  %v142 = vpop.permute.xlu0 %141
  %145 = vset.pattern.permute.xlu0 0
  %146 = vperm.xlu0 %145, %v100
  %v147 = vpop.permute.xlu0 %146
  %150 = vset.pattern.permute.xlu0 0
  %151 = vperm.xlu0 %150, %v101
  %v152 = vpop.permute.xlu0 %151
  %155 = vset.pattern.permute.xlu0 0
  %156 = vperm.xlu0 %155, %v102
  %v157 = vpop.permute.xlu0 %156
  %160 = vset.pattern.permute.xlu0 0
  %161 = vperm.xlu0 %160, %v103
  %v162 = vpop.permute.xlu0 %161
  %165 = vset.pattern.permute.xlu0 0
  %166 = vperm.xlu0 %165, %v104
  %v167 = vpop.permute.xlu0 %166
  %170 = vset.pattern.permute.xlu0 0
  %171 = vperm.xlu0 %170, %v105
  %v172 = vpop.permute.xlu0 %171
  %175 = vset.pattern.permute.xlu0 0
  %176 = vperm.xlu0 %175, %v106
  %v177 = vpop.permute.xlu0 %176
  %180 = vset.pattern.permute.xlu0 0
  %181 = vperm.xlu0 %180, %v107
  %v182 = vpop.permute.xlu0 %181
  %185 = vset.pattern.permute.xlu0 0
  %186 = vperm.xlu0 %185, %v108
  %v187 = vpop.permute.xlu0 %186
  %190 = vset.pattern.permute.xlu0 0
  %191 = vperm.xlu0 %190, %v109
  %v192 = vpop.permute.xlu0 %191
  %195 = vset.pattern.permute.xlu0 0
  %196 = vperm.xlu0 %195, %v110
  %v197 = vpop.permute.xlu0 %196
  %200 = vset.pattern.permute.xlu0 0
  %201 = vperm.xlu0 %200, %v111
  %v202 = vpop.permute.xlu0 %201
  %205 = vset.pattern.permute.xlu0 0
  %206 = vperm.xlu0 %205, %v112
  %v207 = vpop.permute.xlu0 %206
  %210 = vset.pattern.permute.xlu0 0
  %211 = vperm.xlu0 %210, %v113
  %v212 = vpop.permute.xlu0 %211
  %215 = vset.pattern.permute.xlu0 0
  %216 = vperm.xlu0 %215, %v114
  %v217 = vpop.permute.xlu0 %216
  %220 = vset.pattern.permute.xlu0 0
  %221 = vperm.xlu0 %220, %v115
  %v222 = vpop.permute.xlu0 %221
  %225 = vset.pattern.permute.xlu0 0
  %226 = vperm.xlu0 %225, %v116
  %v227 = vpop.permute.xlu0 %226
  %230 = vset.pattern.permute.xlu0 0
  %231 = vperm.xlu0 %230, %v117
  %v232 = vpop.permute.xlu0 %231
  %235 = vset.pattern.permute.xlu0 0
  %236 = vperm.xlu0 %235, %v118
  %v237 = vpop.permute.xlu0 %236
  %240 = vset.pattern.permute.xlu0 0
  %241 = vperm.xlu0 %240, %v119
  %v242 = vpop.permute.xlu0 %241
  %245 = vset.pattern.permute.xlu0 0
  %246 = vperm.xlu0 %245, %v120
  %v247 = vpop.permute.xlu0 %246
  %250 = vset.pattern.permute.xlu0 0
  %251 = vperm.xlu0 %250, %v121
  %v252 = vpop.permute.xlu0 %251
  %255 = vset.pattern.permute.xlu0 0
  %256 = vperm.xlu0 %255, %v122
  %v257 = vpop.permute.xlu0 %256
  %260 = vset.pattern.permute.xlu0 0
  %261 = vperm.xlu0 %260, %v123
  %v262 = vpop.permute.xlu0 %261
  %265 = vset.pattern.permute.xlu0 0
  %266 = vperm.xlu0 %265, %v124
  %v267 = vpop.permute.xlu0 %266
  %270 = vset.pattern.permute.xlu0 0
  %271 = vperm.xlu0 %270, %v125
  %v272 = vpop.permute.xlu0 %271
  %275 = vset.pattern.permute.xlu0 0
  %276 = vperm.xlu0 %275, %v126
  %v277 = vpop.permute.xlu0 %276
  %280 = vset.pattern.permute.xlu0 0
  %281 = vperm.xlu0 %280, %v127
  %v282 = vpop.permute.xlu0 %281
  %285 = vset.pattern.permute.xlu0 0
  %286 = vperm.xlu0 %285, %v128
  %v287 = vpop.permute.xlu0 %286
  %v321 = vunpack.c.l.b16 %v65
  %v322 = vunpack.c.l.b16 %v66
  %v323 = vunpack.c.l.b16 %v67
  %v324 = vunpack.c.l.b16 %v68
  %v325 = vunpack.c.l.b16 %v69
  %v326 = vunpack.c.l.b16 %v70
  %v327 = vunpack.c.l.b16 %v71
  %v328 = vunpack.c.l.b16 %v72
  %v329 = vunpack.c.l.b16 %v73
  %v330 = vunpack.c.l.b16 %v74
  %v331 = vunpack.c.l.b16 %v75
  %v332 = vunpack.c.l.b16 %v76
  %v333 = vunpack.c.l.b16 %v77
  %v334 = vunpack.c.l.b16 %v78
  %v335 = vunpack.c.l.b16 %v79
  %v336 = vunpack.c.l.b16 %v80
  %v337 = vunpack.c.l.b16 %v81
  %v338 = vunpack.c.l.b16 %v82
  %v339 = vunpack.c.l.b16 %v83
  %v340 = vunpack.c.l.b16 %v84
  %v341 = vunpack.c.l.b16 %v85
  %v342 = vunpack.c.l.b16 %v86
  %v343 = vunpack.c.l.b16 %v87
  %v344 = vunpack.c.l.b16 %v88
  %v345 = vunpack.c.l.b16 %v89
  %v346 = vunpack.c.l.b16 %v90
  %v347 = vunpack.c.l.b16 %v91
  %v348 = vunpack.c.l.b16 %v92
  %v349 = vunpack.c.l.b16 %v93
  %v350 = vunpack.c.l.b16 %v94
  %v351 = vunpack.c.l.b16 %v95
  %v352 = vunpack.c.l.b16 %v96
  %v353 = vpack.c.b16 %v322, %v321
  %v354 = vpack.c.b16 %v324, %v323
  %v355 = vpack.c.b16 %v326, %v325
  %v356 = vpack.c.b16 %v328, %v327
  %v357 = vpack.c.b16 %v330, %v329
  %v358 = vpack.c.b16 %v332, %v331
  %v359 = vpack.c.b16 %v334, %v333
  %v360 = vpack.c.b16 %v336, %v335
  %v361 = vpack.c.b16 %v338, %v337
  %v362 = vpack.c.b16 %v340, %v339
  %v363 = vpack.c.b16 %v342, %v341
  %v364 = vpack.c.b16 %v344, %v343
  %v365 = vpack.c.b16 %v346, %v345
  %v366 = vpack.c.b16 %v348, %v347
  %v367 = vpack.c.b16 %v350, %v349
  %v368 = vpack.c.b16 %v352, %v351
  %vm369 = vcmask 261120
  %v371 = vsel %vm369, %v353, 0
  %v374 = vsel %vm369, %v354, 0
  %v377 = vsel %vm369, %v355, 0
  %v380 = vsel %vm369, %v356, 0
  %v383 = vsel %vm369, %v357, 0
  %v386 = vsel %vm369, %v358, 0
  %v389 = vsel %vm369, %v359, 0
  %v392 = vsel %vm369, %v360, 0
  %v395 = vsel %vm369, %v361, 0
  %v398 = vsel %vm369, %v362, 0
  %v401 = vsel %vm369, %v363, 0
  %v404 = vsel %vm369, %v364, 0
  %v407 = vsel %vm369, %v365, 0
  %v410 = vsel %vm369, %v366, 0
  %v413 = vsel %vm369, %v367, 0
  %v416 = vsel %vm369, %v368, 0
  %v419 = vsel %vm369, %v57, 0
  %v422 = vsel %vm369, %v58, 0
  %v425 = vsel %vm369, %v59, 0
  %v428 = vsel %vm369, %v60, 0
  %v431 = vsel %vm369, %v61, 0
  %v434 = vsel %vm369, %v62, 0
  %v437 = vsel %vm369, %v63, 0
  %v440 = vsel %vm369, %v64, 0
  %442 = vmatpush.bf16.xpose.msra.mxu0 %v440
  %443 = vmatpush.bf16.xpose.msra.mxu0 %v437
  %444 = vmatpush.bf16.xpose.msra.mxu0 %v434
  %445 = vmatpush.bf16.xpose.msra.mxu0 %v431
  %446 = vmatpush.bf16.xpose.msra.mxu0 %v428
  %447 = vmatpush.bf16.xpose.msra.mxu0 %v425
  %448 = vmatpush.bf16.xpose.msra.mxu0 %v422
  %449 = vmatpush.bf16.xpose.msra.mxu0 %v419
  %450 = vmatmul.bf16.gmra.mxu0 %v371
  %v451 = vpop.f32.mrf.mxu0
  %v452 = vadd.f32 %v132, %v451
  %v453 = vpop.f32.mrf.mxu0
  %v454 = vadd.f32 %v137, %v453
  %455 = vmatmul.bf16.gmra.mxu0 %v374
  %v456 = vpop.f32.mrf.mxu0
  %v457 = vadd.f32 %v142, %v456
  %v458 = vpop.f32.mrf.mxu0
  %v459 = vadd.f32 %v147, %v458
  %460 = vmatmul.bf16.gmra.mxu0 %v377
  %v461 = vpop.f32.mrf.mxu0
  %v462 = vadd.f32 %v152, %v461
  %v463 = vpop.f32.mrf.mxu0
  %v464 = vadd.f32 %v157, %v463
  %465 = vmatmul.bf16.gmra.mxu0 %v380
  %v466 = vpop.f32.mrf.mxu0
  %v467 = vadd.f32 %v162, %v466
  %v468 = vpop.f32.mrf.mxu0
  %v469 = vadd.f32 %v167, %v468
  %470 = vmatmul.bf16.gmra.mxu0 %v383
  %v471 = vpop.f32.mrf.mxu0
  %v472 = vadd.f32 %v172, %v471
  %v473 = vpop.f32.mrf.mxu0
  %v474 = vadd.f32 %v177, %v473
  %475 = vmatmul.bf16.gmra.mxu0 %v386
  %v476 = vpop.f32.mrf.mxu0
  %v477 = vadd.f32 %v182, %v476
  %v478 = vpop.f32.mrf.mxu0
  %v479 = vadd.f32 %v187, %v478
  %480 = vmatmul.bf16.gmra.mxu0 %v389
  %v481 = vpop.f32.mrf.mxu0
  %v482 = vadd.f32 %v192, %v481
  %v483 = vpop.f32.mrf.mxu0
  %v484 = vadd.f32 %v197, %v483
  %485 = vmatmul.bf16.gmra.mxu0 %v392
  %v486 = vpop.f32.mrf.mxu0
  %v487 = vadd.f32 %v202, %v486
  %v488 = vpop.f32.mrf.mxu0
  %v489 = vadd.f32 %v207, %v488
  %490 = vmatmul.bf16.gmra.mxu0 %v395
  %v491 = vpop.f32.mrf.mxu0
  %v492 = vadd.f32 %v212, %v491
  %v493 = vpop.f32.mrf.mxu0
  %v494 = vadd.f32 %v217, %v493
  %495 = vmatmul.bf16.gmra.mxu0 %v398
  %v496 = vpop.f32.mrf.mxu0
  %v497 = vadd.f32 %v222, %v496
  %v498 = vpop.f32.mrf.mxu0
  %v499 = vadd.f32 %v227, %v498
  %500 = vmatmul.bf16.gmra.mxu0 %v401
  %v501 = vpop.f32.mrf.mxu0
  %v502 = vadd.f32 %v232, %v501
  %v503 = vpop.f32.mrf.mxu0
  %v504 = vadd.f32 %v237, %v503
  %505 = vmatmul.bf16.gmra.mxu0 %v404
  %v506 = vpop.f32.mrf.mxu0
  %v507 = vadd.f32 %v242, %v506
  %v508 = vpop.f32.mrf.mxu0
  %v509 = vadd.f32 %v247, %v508
  %510 = vmatmul.bf16.gmra.mxu0 %v407
  %v511 = vpop.f32.mrf.mxu0
  %v512 = vadd.f32 %v252, %v511
  %v513 = vpop.f32.mrf.mxu0
  %v514 = vadd.f32 %v257, %v513
  %515 = vmatmul.bf16.gmra.mxu0 %v410
  %v516 = vpop.f32.mrf.mxu0
  %v517 = vadd.f32 %v262, %v516
  %v518 = vpop.f32.mrf.mxu0
  %v519 = vadd.f32 %v267, %v518
  %520 = vmatmul.bf16.gmra.mxu0 %v413
  %v521 = vpop.f32.mrf.mxu0
  %v522 = vadd.f32 %v272, %v521
  %v523 = vpop.f32.mrf.mxu0
  %v524 = vadd.f32 %v277, %v523
  %525 = vmatmul.bf16.gmra.mxu0 %v416
  %v526 = vpop.f32.mrf.mxu0
  %v527 = vadd.f32 %v282, %v526
  %v528 = vpop.f32.mrf.mxu0
  %v529 = vadd.f32 %v287, %v528
  %530 = vdwg.mxu0
  %v531 = vmax.f32 %v452, 0.0
  %v532 = vmax.f32 %v454, 0.0
  %v533 = vmax.f32 %v457, 0.0
  %v534 = vmax.f32 %v459, 0.0
  %v535 = vmax.f32 %v462, 0.0
  %v536 = vmax.f32 %v464, 0.0
  %v537 = vmax.f32 %v467, 0.0
  %v538 = vmax.f32 %v469, 0.0
  %v539 = vmax.f32 %v472, 0.0
  %v540 = vmax.f32 %v474, 0.0
  %v541 = vmax.f32 %v477, 0.0
  %v542 = vmax.f32 %v479, 0.0
  %v543 = vmax.f32 %v482, 0.0
  %v544 = vmax.f32 %v484, 0.0
  %v545 = vmax.f32 %v487, 0.0
  %v546 = vmax.f32 %v489, 0.0
  %v547 = vmax.f32 %v492, 0.0
  %v548 = vmax.f32 %v494, 0.0
  %v549 = vmax.f32 %v497, 0.0
  %v550 = vmax.f32 %v499, 0.0
  %v551 = vmax.f32 %v502, 0.0
  %v552 = vmax.f32 %v504, 0.0
  %v553 = vmax.f32 %v507, 0.0
  %v554 = vmax.f32 %v509, 0.0
  %v555 = vmax.f32 %v512, 0.0
  %v556 = vmax.f32 %v514, 0.0
  %v557 = vmax.f32 %v517, 0.0
  %v558 = vmax.f32 %v519, 0.0
  %v559 = vmax.f32 %v522, 0.0
  %v560 = vmax.f32 %v524, 0.0
  %v561 = vmax.f32 %v527, 0.0
  %v562 = vmax.f32 %v529, 0.0
  %v563 = vpack.c.bf16 %v532, %v531
  %v564 = vpack.c.bf16 %v534, %v533
  %v565 = vpack.c.bf16 %v536, %v535
  %v566 = vpack.c.bf16 %v538, %v537
  %v567 = vpack.c.bf16 %v540, %v539
  %v568 = vpack.c.bf16 %v542, %v541
  %v569 = vpack.c.bf16 %v544, %v543
  %v570 = vpack.c.bf16 %v546, %v545
  %v571 = vpack.c.bf16 %v548, %v547
  %v572 = vpack.c.bf16 %v550, %v549
  %v573 = vpack.c.bf16 %v552, %v551
  %v574 = vpack.c.bf16 %v554, %v553
  %v575 = vpack.c.bf16 %v556, %v555
  %v576 = vpack.c.bf16 %v558, %v557
  %v577 = vpack.c.bf16 %v560, %v559
  %v578 = vpack.c.bf16 %v562, %v561
  %v579 = vld [vmem:[%s3] sm:$0xff]
  %v580 = vld [vmem:[%s3 + $0x8] sm:$0xff]
  %v581 = vld [vmem:[%s3 + $0x10] sm:$0xff]
  %v582 = vld [vmem:[%s3 + $0x18] sm:$0xff]
  %v583 = vld [vmem:[%s3 + $0x20] sm:$0xff]
  %v584 = vld [vmem:[%s3 + $0x28] sm:$0xff]
  %v585 = vld [vmem:[%s3 + $0x30] sm:$0xff]
  %v586 = vld [vmem:[%s3 + $0x38] sm:$0xff]
  %v587 = vld [vmem:[%s3 + $0x40] sm:$0xff]
  %v588 = vld [vmem:[%s3 + $0x48] sm:$0xff]
  %v589 = vld [vmem:[%s3 + $0x50] sm:$0xff]
  %v590 = vld [vmem:[%s3 + $0x58] sm:$0xff]
  %v591 = vld [vmem:[%s3 + $0x60] sm:$0xff]
  %v592 = vld [vmem:[%s3 + $0x68] sm:$0xff]
  %v593 = vld [vmem:[%s3 + $0x70] sm:$0xff]
  %v594 = vld [vmem:[%s3 + $0x78] sm:$0xff]
  %v595 = vld [vmem:[%s4] sm:$0xff]
  %v596 = vld [vmem:[%s4 + $0x8] sm:$0xff]
  %v597 = vld [vmem:[%s4 + $0x10] sm:$0xff]
  %v598 = vld [vmem:[%s4 + $0x18] sm:$0xff]
  %v599 = vld [vmem:[%s4 + $0x20] sm:$0xff]
  %v600 = vld [vmem:[%s4 + $0x28] sm:$0xff]
  %v601 = vld [vmem:[%s4 + $0x30] sm:$0xff]
  %v602 = vld [vmem:[%s4 + $0x38] sm:$0xff]
  %v603 = vld [vmem:[%s4 + $0x40] sm:$0xff]
  %v604 = vld [vmem:[%s4 + $0x48] sm:$0xff]
  %v605 = vld [vmem:[%s4 + $0x50] sm:$0xff]
  %v606 = vld [vmem:[%s4 + $0x58] sm:$0xff]
  %v607 = vld [vmem:[%s4 + $0x60] sm:$0xff]
  %v608 = vld [vmem:[%s4 + $0x68] sm:$0xff]
  %v609 = vld [vmem:[%s4 + $0x70] sm:$0xff]
  %v610 = vld [vmem:[%s4 + $0x78] sm:$0xff]
  %612 = vset.pattern.permute.xlu0 0
  %613 = vperm.xlu0 %612, %v595
  %v614 = vpop.permute.xlu0 %613
  %617 = vset.pattern.permute.xlu0 0
  %618 = vperm.xlu0 %617, %v596
  %v619 = vpop.permute.xlu0 %618
  %622 = vset.pattern.permute.xlu0 0
  %623 = vperm.xlu0 %622, %v597
  %v624 = vpop.permute.xlu0 %623
  %627 = vset.pattern.permute.xlu0 0
  %628 = vperm.xlu0 %627, %v598
  %v629 = vpop.permute.xlu0 %628
  %632 = vset.pattern.permute.xlu0 0
  %633 = vperm.xlu0 %632, %v599
  %v634 = vpop.permute.xlu0 %633
  %637 = vset.pattern.permute.xlu0 0
  %638 = vperm.xlu0 %637, %v600
  %v639 = vpop.permute.xlu0 %638
  %642 = vset.pattern.permute.xlu0 0
  %643 = vperm.xlu0 %642, %v601
  %v644 = vpop.permute.xlu0 %643
  %647 = vset.pattern.permute.xlu0 0
  %648 = vperm.xlu0 %647, %v602
  %v649 = vpop.permute.xlu0 %648
  %652 = vset.pattern.permute.xlu0 0
  %653 = vperm.xlu0 %652, %v603
  %v654 = vpop.permute.xlu0 %653
  %657 = vset.pattern.permute.xlu0 0
  %658 = vperm.xlu0 %657, %v604
  %v659 = vpop.permute.xlu0 %658
  %662 = vset.pattern.permute.xlu0 0
  %663 = vperm.xlu0 %662, %v605
  %v664 = vpop.permute.xlu0 %663
  %667 = vset.pattern.permute.xlu0 0
  %668 = vperm.xlu0 %667, %v606
  %v669 = vpop.permute.xlu0 %668
  %672 = vset.pattern.permute.xlu0 0
  %673 = vperm.xlu0 %672, %v607
  %v674 = vpop.permute.xlu0 %673
  %677 = vset.pattern.permute.xlu0 0
  %678 = vperm.xlu0 %677, %v608
  %v679 = vpop.permute.xlu0 %678
  %682 = vset.pattern.permute.xlu0 0
  %683 = vperm.xlu0 %682, %v609
  %v684 = vpop.permute.xlu0 %683
  %687 = vset.pattern.permute.xlu0 0
  %688 = vperm.xlu0 %687, %v610
  %v689 = vpop.permute.xlu0 %688
  %v707 = vunpack.c.l.b16 %v579
  %v708 = vunpack.c.h.b16 %v579
  %v709 = vunpack.c.l.b16 %v580
  %v710 = vunpack.c.h.b16 %v580
  %v711 = vunpack.c.l.b16 %v581
  %v712 = vunpack.c.h.b16 %v581
  %v713 = vunpack.c.l.b16 %v582
  %v714 = vunpack.c.h.b16 %v582
  %v715 = vunpack.c.l.b16 %v583
  %v716 = vunpack.c.h.b16 %v583
  %v717 = vunpack.c.l.b16 %v584
  %v718 = vunpack.c.h.b16 %v584
  %v719 = vunpack.c.l.b16 %v585
  %v720 = vunpack.c.h.b16 %v585
  %v721 = vunpack.c.l.b16 %v586
  %v722 = vunpack.c.h.b16 %v586
  %v723 = vunpack.c.l.b16 %v587
  %v724 = vunpack.c.h.b16 %v587
  %v725 = vunpack.c.l.b16 %v588
  %v726 = vunpack.c.h.b16 %v588
  %v727 = vunpack.c.l.b16 %v589
  %v728 = vunpack.c.h.b16 %v589
  %v729 = vunpack.c.l.b16 %v590
  %v730 = vunpack.c.h.b16 %v590
  %v731 = vunpack.c.l.b16 %v591
  %v732 = vunpack.c.h.b16 %v591
  %v733 = vunpack.c.l.b16 %v592
  %v734 = vunpack.c.h.b16 %v592
  %v735 = vunpack.c.l.b16 %v593
  %v736 = vunpack.c.h.b16 %v593
  %v737 = vunpack.c.l.b16 %v594
  %v738 = vunpack.c.h.b16 %v594
  %v739 = vpack.c.b16 %v709, %v707
  %v740 = vpack.c.b16 %v710, %v708
  %v741 = vpack.c.b16 %v713, %v711
  %v742 = vpack.c.b16 %v714, %v712
  %v743 = vpack.c.b16 %v717, %v715
  %v744 = vpack.c.b16 %v718, %v716
  %v745 = vpack.c.b16 %v721, %v719
  %v746 = vpack.c.b16 %v722, %v720
  %v747 = vpack.c.b16 %v725, %v723
  %v748 = vpack.c.b16 %v726, %v724
  %v749 = vpack.c.b16 %v729, %v727
  %v750 = vpack.c.b16 %v730, %v728
  %v751 = vpack.c.b16 %v733, %v731
  %v752 = vpack.c.b16 %v734, %v732
  %v753 = vpack.c.b16 %v737, %v735
  %v754 = vpack.c.b16 %v738, %v736
  %771 = vmatpush.bf16.msra.mxu0 %v570
  %772 = vmatpush.bf16.msra.mxu0 %v569
  %773 = vmatpush.bf16.msra.mxu0 %v568
  %774 = vmatpush.bf16.msra.mxu0 %v567
  %775 = vmatpush.bf16.msra.mxu0 %v566
  %776 = vmatpush.bf16.msra.mxu0 %v565
  %777 = vmatpush.bf16.msra.mxu0 %v564
  %778 = vmatpush.bf16.msra.mxu0 %v563
  %779 = vmatmul.bf16.gmra.mxu0 %v739
  %v780 = vpop.f32.mrf.mxu0
  %v781 = vadd.f32 %v614, %v780
  %v782 = vpop.f32.mrf.mxu0
  %v783 = vadd.f32 %v619, %v782
  %784 = vmatmul.bf16.gmra.mxu0 %v741
  %v785 = vpop.f32.mrf.mxu0
  %v786 = vadd.f32 %v624, %v785
  %v787 = vpop.f32.mrf.mxu0
  %v788 = vadd.f32 %v629, %v787
  %789 = vmatmul.bf16.gmra.mxu0 %v743
  %v790 = vpop.f32.mrf.mxu0
  %v791 = vadd.f32 %v634, %v790
  %v792 = vpop.f32.mrf.mxu0
  %v793 = vadd.f32 %v639, %v792
  %794 = vmatmul.bf16.gmra.mxu0 %v745
  %v795 = vpop.f32.mrf.mxu0
  %v796 = vadd.f32 %v644, %v795
  %v797 = vpop.f32.mrf.mxu0
  %v798 = vadd.f32 %v649, %v797
  %799 = vmatmul.bf16.gmra.mxu0 %v747
  %v800 = vpop.f32.mrf.mxu0
  %v801 = vadd.f32 %v654, %v800
  %v802 = vpop.f32.mrf.mxu0
  %v803 = vadd.f32 %v659, %v802
  %804 = vmatmul.bf16.gmra.mxu0 %v749
  %v805 = vpop.f32.mrf.mxu0
  %v806 = vadd.f32 %v664, %v805
  %v807 = vpop.f32.mrf.mxu0
  %v808 = vadd.f32 %v669, %v807
  %809 = vmatmul.bf16.gmra.mxu0 %v751
  %v810 = vpop.f32.mrf.mxu0
  %v811 = vadd.f32 %v674, %v810
  %v812 = vpop.f32.mrf.mxu0
  %v813 = vadd.f32 %v679, %v812
  %814 = vmatmul.bf16.gmra.mxu0 %v753
  %v815 = vpop.f32.mrf.mxu0
  %v816 = vadd.f32 %v684, %v815
  %v817 = vpop.f32.mrf.mxu0
  %v818 = vadd.f32 %v689, %v817
  %819 = vdwg.mxu0
  %820 = vmatpush.bf16.msra.mxu0 %v578
  %821 = vmatpush.bf16.msra.mxu0 %v577
  %822 = vmatpush.bf16.msra.mxu0 %v576
  %823 = vmatpush.bf16.msra.mxu0 %v575
  %824 = vmatpush.bf16.msra.mxu0 %v574
  %825 = vmatpush.bf16.msra.mxu0 %v573
  %826 = vmatpush.bf16.msra.mxu0 %v572
  %827 = vmatpush.bf16.msra.mxu0 %v571
  %828 = vmatmul.bf16.gmra.mxu0 %v740
  %v829 = vpop.f32.mrf.mxu0
  %v830 = vadd.f32 %v781, %v829
  %v831 = vpop.f32.mrf.mxu0
  %v832 = vadd.f32 %v783, %v831
  %833 = vmatmul.bf16.gmra.mxu0 %v742
  %v834 = vpop.f32.mrf.mxu0
  %v835 = vadd.f32 %v786, %v834
  %v836 = vpop.f32.mrf.mxu0
  %v837 = vadd.f32 %v788, %v836
  %838 = vmatmul.bf16.gmra.mxu0 %v744
  %v839 = vpop.f32.mrf.mxu0
  %v840 = vadd.f32 %v791, %v839
  %v841 = vpop.f32.mrf.mxu0
  %v842 = vadd.f32 %v793, %v841
  %843 = vmatmul.bf16.gmra.mxu0 %v746
  %v844 = vpop.f32.mrf.mxu0
  %v845 = vadd.f32 %v796, %v844
  %v846 = vpop.f32.mrf.mxu0
  %v847 = vadd.f32 %v798, %v846
  %848 = vmatmul.bf16.gmra.mxu0 %v748
  %v849 = vpop.f32.mrf.mxu0
  %v850 = vadd.f32 %v801, %v849
  %v851 = vpop.f32.mrf.mxu0
  %v852 = vadd.f32 %v803, %v851
  %853 = vmatmul.bf16.gmra.mxu0 %v750
  %v854 = vpop.f32.mrf.mxu0
  %v855 = vadd.f32 %v806, %v854
  %v856 = vpop.f32.mrf.mxu0
  %v857 = vadd.f32 %v808, %v856
  %858 = vmatmul.bf16.gmra.mxu0 %v752
  %v859 = vpop.f32.mrf.mxu0
  %v860 = vadd.f32 %v811, %v859
  %v861 = vpop.f32.mrf.mxu0
  %v862 = vadd.f32 %v813, %v861
  %863 = vmatmul.bf16.gmra.mxu0 %v754
  %v864 = vpop.f32.mrf.mxu0
  %v865 = vadd.f32 %v816, %v864
  %v866 = vpop.f32.mrf.mxu0
  %v867 = vadd.f32 %v818, %v866
  %868 = vdwg.mxu0
  %v869 = vmax.f32 %v830, 0.0
  %v870 = vmax.f32 %v832, 0.0
  %v871 = vmax.f32 %v835, 0.0
  %v872 = vmax.f32 %v837, 0.0
  %v873 = vmax.f32 %v840, 0.0
  %v874 = vmax.f32 %v842, 0.0
  %v875 = vmax.f32 %v845, 0.0
  %v876 = vmax.f32 %v847, 0.0
  %v877 = vmax.f32 %v850, 0.0
  %v878 = vmax.f32 %v852, 0.0
  %v879 = vmax.f32 %v855, 0.0
  %v880 = vmax.f32 %v857, 0.0
  %v881 = vmax.f32 %v860, 0.0
  %v882 = vmax.f32 %v862, 0.0
  %v883 = vmax.f32 %v865, 0.0
  %v884 = vmax.f32 %v867, 0.0
  %v885 = vpack.c.bf16 %v870, %v869
  %v886 = vpack.c.bf16 %v872, %v871
  %v887 = vpack.c.bf16 %v874, %v873
  %v888 = vpack.c.bf16 %v876, %v875
  %v889 = vpack.c.bf16 %v878, %v877
  %v890 = vpack.c.bf16 %v880, %v879
  %v891 = vpack.c.bf16 %v882, %v881
  %v892 = vpack.c.bf16 %v884, %v883
  %v893 = vld [vmem:[%s5] sm:$0xf]
  %v894 = vld [vmem:[%s5 + $0x4] sm:$0xf]
  %v895 = vld [vmem:[%s5 + $0x8] sm:$0xf]
  %v896 = vld [vmem:[%s5 + $0xc] sm:$0xf]
  %v897 = vld [vmem:[%s5 + $0x10] sm:$0xf]
  %v898 = vld [vmem:[%s5 + $0x14] sm:$0xf]
  %v899 = vld [vmem:[%s5 + $0x18] sm:$0xf]
  %v900 = vld [vmem:[%s5 + $0x1c] sm:$0xf]
  %v901 = vld [vmem:[%s6] sm:$0xff]
  %v902 = vld [vmem:[%s6 + $0x8] sm:$0xff]
  %v903 = vld [vmem:[%s6 + $0x10] sm:$0xff]
  %v904 = vld [vmem:[%s6 + $0x18] sm:$0xff]
  %v905 = vld [vmem:[%s6 + $0x20] sm:$0xff]
  %v906 = vld [vmem:[%s6 + $0x28] sm:$0xff]
  %v907 = vld [vmem:[%s6 + $0x30] sm:$0xff]
  %v908 = vld [vmem:[%s6 + $0x38] sm:$0xff]
  %910 = vset.pattern.permute.xlu0 0
  %911 = vperm.xlu0 %910, %v901
  %v912 = vpop.permute.xlu0 %911
  %915 = vset.pattern.permute.xlu0 0
  %916 = vperm.xlu0 %915, %v902
  %v917 = vpop.permute.xlu0 %916
  %920 = vset.pattern.permute.xlu0 0
  %921 = vperm.xlu0 %920, %v903
  %v922 = vpop.permute.xlu0 %921
  %925 = vset.pattern.permute.xlu0 0
  %926 = vperm.xlu0 %925, %v904
  %v927 = vpop.permute.xlu0 %926
  %930 = vset.pattern.permute.xlu0 0
  %931 = vperm.xlu0 %930, %v905
  %v932 = vpop.permute.xlu0 %931
  %935 = vset.pattern.permute.xlu0 0
  %936 = vperm.xlu0 %935, %v906
  %v937 = vpop.permute.xlu0 %936
  %940 = vset.pattern.permute.xlu0 0
  %941 = vperm.xlu0 %940, %v907
  %v942 = vpop.permute.xlu0 %941
  %945 = vset.pattern.permute.xlu0 0
  %946 = vperm.xlu0 %945, %v908
  %v947 = vpop.permute.xlu0 %946
  %v957 = vunpack.c.l.b16 %v893
  %v958 = vunpack.c.l.b16 %v894
  %v959 = vunpack.c.l.b16 %v895
  %v960 = vunpack.c.l.b16 %v896
  %v961 = vunpack.c.l.b16 %v897
  %v962 = vunpack.c.l.b16 %v898
  %v963 = vunpack.c.l.b16 %v899
  %v964 = vunpack.c.l.b16 %v900
  %v965 = vpack.c.b16 %v958, %v957
  %v966 = vpack.c.b16 %v960, %v959
  %v967 = vpack.c.b16 %v962, %v961
  %v968 = vpack.c.b16 %v964, %v963
  %973 = vmatpush.bf16.msra.mxu0 %v892
  %974 = vmatpush.bf16.msra.mxu0 %v891
  %975 = vmatpush.bf16.msra.mxu0 %v890
  %976 = vmatpush.bf16.msra.mxu0 %v889
  %977 = vmatpush.bf16.msra.mxu0 %v888
  %978 = vmatpush.bf16.msra.mxu0 %v887
  %979 = vmatpush.bf16.msra.mxu0 %v886
  %980 = vmatpush.bf16.msra.mxu0 %v885
  %981 = vmatmul.bf16.gmra.mxu0 %v965
  %v982 = vpop.f32.mrf.mxu0
  %v983 = vadd.f32 %v912, %v982
  %v984 = vpop.f32.mrf.mxu0
  %v985 = vadd.f32 %v917, %v984
  %986 = vmatmul.bf16.gmra.mxu0 %v966
  %v987 = vpop.f32.mrf.mxu0
  %v988 = vadd.f32 %v922, %v987
  %v989 = vpop.f32.mrf.mxu0
  %v990 = vadd.f32 %v927, %v989
  %991 = vmatmul.bf16.gmra.mxu0 %v967
  %v992 = vpop.f32.mrf.mxu0
  %v993 = vadd.f32 %v932, %v992
  %v994 = vpop.f32.mrf.mxu0
  %v995 = vadd.f32 %v937, %v994
  %996 = vmatmul.bf16.gmra.mxu0 %v968
  %v997 = vpop.f32.mrf.mxu0
  %v998 = vadd.f32 %v942, %v997
  %v999 = vpop.f32.mrf.mxu0
  %v1000 = vadd.f32 %v947, %v999
  %1001 = vdwg.mxu0
  %v1002 = vmax.f32 %v983, 0.0
  %v1003 = vmax.f32 %v985, 0.0
  %v1004 = vmax.f32 %v988, 0.0
  %v1005 = vmax.f32 %v990, 0.0
  %v1006 = vmax.f32 %v993, 0.0
  %v1007 = vmax.f32 %v995, 0.0
  %v1008 = vmax.f32 %v998, 0.0
  %v1009 = vmax.f32 %v1000, 0.0
  %v1010 = vpack.c.bf16 %v1003, %v1002
  %v1011 = vpack.c.bf16 %v1005, %v1004
  %v1012 = vpack.c.bf16 %v1007, %v1006
  %v1013 = vpack.c.bf16 %v1009, %v1008
  %v1014 = vld [vmem:[%s7] sm:$0xf]
  %v1015 = vld [vmem:[%s7 + $0x4] sm:$0xf]
  %v1016 = vld [vmem:[%s7 + $0x8] sm:$0xf]
  %v1017 = vld [vmem:[%s7 + $0xc] sm:$0xf]
  %v1018 = vld [vmem:[%s8] sm:$0xff]
  %v1019 = vld [vmem:[%s8 + $0x8] sm:$0xff]
  %v1020 = vld [vmem:[%s8 + $0x10] sm:$0xff]
  %v1021 = vld [vmem:[%s8 + $0x18] sm:$0xff]
  %1023 = vset.pattern.permute.xlu0 0
  %1024 = vperm.xlu0 %1023, %v1018
  %v1025 = vpop.permute.xlu0 %1024
  %1028 = vset.pattern.permute.xlu0 0
  %1029 = vperm.xlu0 %1028, %v1019
  %v1030 = vpop.permute.xlu0 %1029
  %1033 = vset.pattern.permute.xlu0 0
  %1034 = vperm.xlu0 %1033, %v1020
  %v1035 = vpop.permute.xlu0 %1034
  %1038 = vset.pattern.permute.xlu0 0
  %1039 = vperm.xlu0 %1038, %v1021
  %v1040 = vpop.permute.xlu0 %1039
  %v1046 = vunpack.c.l.b16 %v1014
  %v1047 = vunpack.c.l.b16 %v1015
  %v1048 = vunpack.c.l.b16 %v1016
  %v1049 = vunpack.c.l.b16 %v1017
  %v1050 = vpack.c.b16 %v1047, %v1046
  %v1051 = vpack.c.b16 %v1049, %v1048
  %vm1052 = vcmask 523264
  %v1054 = vsel %vm1052, %v1050, 0
  %v1057 = vsel %vm1052, %v1051, 0
  %1059 = vmatpush.bf16.msra.mxu0 0
  %1060 = vmatpush.bf16.msra.mxu0 0
  %1061 = vmatpush.bf16.msra.mxu0 0
  %1062 = vmatpush.bf16.msra.mxu0 0
  %1063 = vmatpush.bf16.msra.mxu0 %v1013
  %1064 = vmatpush.bf16.msra.mxu0 %v1012
  %1065 = vmatpush.bf16.msra.mxu0 %v1011
  %1066 = vmatpush.bf16.msra.mxu0 %v1010
  %1067 = vmatmul.bf16.gmra.mxu0 %v1054
  %v1068 = vpop.f32.mrf.mxu0
  %v1069 = vadd.f32 %v1025, %v1068
  %v1070 = vpop.f32.mrf.mxu0
  %v1071 = vadd.f32 %v1030, %v1070
  %1072 = vmatmul.bf16.gmra.mxu0 %v1057
  %v1073 = vpop.f32.mrf.mxu0
  %v1074 = vadd.f32 %v1035, %v1073
  %v1075 = vpop.f32.mrf.mxu0
  %v1076 = vadd.f32 %v1040, %v1075
  %1077 = vdwg.mxu0
  %v1078 = vmax.f32 %v1069, 0.0
  %v1079 = vmax.f32 %v1071, 0.0
  %v1080 = vmax.f32 %v1074, 0.0
  %v1081 = vmax.f32 %v1076, 0.0
  %v1082 = vld [vmem:[%s9] sm:$0xff]
  %v1083 = vld [vmem:[%s9 + $0x8] sm:$0xff]
  %v1084 = vld [vmem:[%s9 + $0x10] sm:$0xff]
  %v1085 = vld [vmem:[%s9 + $0x18] sm:$0xff]
  %v1086 = vld [vmem:[#allocation2] sm:$0x1]
  %1088 = vset.pattern.permute.xlu0 0
  %1089 = vperm.xlu0 %1088, %v1082
  %v1090 = vpop.permute.xlu0 %1089
  %1093 = vset.pattern.permute.xlu0 0
  %1094 = vperm.xlu0 %1093, %v1083
  %v1095 = vpop.permute.xlu0 %1094
  %1098 = vset.pattern.permute.xlu0 0
  %1099 = vperm.xlu0 %1098, %v1084
  %v1100 = vpop.permute.xlu0 %1099
  %1103 = vset.pattern.permute.xlu0 0
  %1104 = vperm.xlu0 %1103, %v1085
  %v1105 = vpop.permute.xlu0 %1104
  %v1107 = vmul.f32 %v1090, %v1078
  %v1108 = vmul.f32 %v1095, %v1079
  %v1109 = vmul.f32 %v1100, %v1080
  %v1110 = vmul.f32 %v1105, %v1081
  %v1111 = vadd.f32 %v1107, %v1108
  %v1112 = vadd.f32 %v1111, %v1109
  %v1113 = vadd.f32 %v1112, %v1110
  %v1114 = vrot.slane %v1113, 4
  %v1115 = vadd.f32 %v1113, %v1114
  %v1116 = vrot.slane %v1115, 2
  %v1117 = vadd.f32 %v1115, %v1116
  %v1118 = vrot.slane %v1117, 1
  %v1119 = vadd.f32 %v1117, %v1118
  %1121 = vset.pattern.permute.xlu0 0
  %1122 = vperm.xlu0 %1121, %v1086
  %v1123 = vpop.permute.xlu0 %1122
  %v1125 = vperm.slane %v1123, 0
  %v1126 = vadd.f32 %v1119, %v1125
  %v1127 = vxor.u32 %v1126, 2147483648
  %v1128 = vmul.f32 %v1127, 1.442695
  %v1129 = vpow.pop %v1128
  %v1130 = vadd.f32 %v1129, 1.0
  %v1131 = vrcp.pop %v1130
  %v1132 = vmul.f32 %v1130, %v1131
  %v1133 = vsub.f32 1.0, %v1132
  %v1134 = vmul.f32 %v1131, %v1133
  %v1135 = vadd.f32 %v1131, %v1134
  %vm1136 = vweird.f32 %v1130
  %vm1137 = vweird.f32 %v1131
  %vm1138 = vmor %vm1136, %vm1137
  %v1139 = vsel %vm1138, %v1131, %v1135
  %v1140 = vand.u32 2147483647, %v1130
  %vm1141 = vcmp.eq.f32.partialorder %v1140, 8.507059e+37
  %v1142 = vand.u32 %v1130, 2147483648
  %v1143 = vor.u32 1.1754944e-38, %v1142
  %v1144 = vsel %vm1141, %v1143, %v1139
  %v1145 = vmul.f32 1.0, %v1144
  %1146 = vst [vmem:[%s11] sm:$0x1] %v1145
  // Predicated region
  $region46: #{mlp_forward.1} parent=0 // pred_check
    _
  $region47: #{mlp_forward.1} parent=0 // pred_check_branch
    %1148 = sbr.rel (0) target = $region49
  $region48: #{mlp_forward.1} parent=0 // pred_region
    _
  $region49: #{mlp_forward.1} parent=0 // pred_fallthru
    _
  // Predicated region
  $region50: #{mlp_forward.1} parent=0 // pred_check
    _
  $region51: #{mlp_forward.1} parent=0 // pred_check_branch
    %1150 = sbr.rel (0) target = $region53
  $region52: #{mlp_forward.1} parent=0 // pred_region
    _
  $region53: #{mlp_forward.1} parent=0 // pred_fallthru
    _

</llo_original>
